<compile_context>
chip_gen: v7x
topology: tpu7x:2x2x1
jax: 0.10.0
libtpu: 0.0.40
codegen_flags: <defaults>
</compile_context>

<pallas_src>
import functools

import jax
import jax.numpy as jnp
from jax.experimental import pallas as pl
from jax.experimental.pallas import tpu as pltpu

IN_FEATURES = 8
H1 = 16
H2 = 32
NUM_CLASSES = 30      # y.max() + 1 for abalone Rings (max ring count = 29)
PACK = 16             # samples packed per lane-row: 16 * 8 features = 128 lanes
TB_DEFAULT = 16384    # batch tile in samples; multiple of 128 (=> rows % 8 == 0)


def _round_up(x, m):
    return ((x + m - 1) // m) * m


def mlp_kernel(x_ref, w1_ref, b1_ref, w2_ref, b2_ref, w3_ref, b3_ref, o_ref):
    """Packed-batch MLP.

    Each row of x holds PACK=16 samples side by side on the lanes
    (16 * 8 features = 128 lanes).  Weights are block-diagonal
    kron(I_16, W^T), so a single lane-dense matmul applies the layer to all
    16 samples of every row.  Everything stays lane-dense; no transposes.
    """
    x = x_ref[...]                                                   # (R, 128)

    h1 = jnp.dot(x, w1_ref[...], preferred_element_type=jnp.float32)
    h1 = jnp.maximum(h1 + b1_ref[...], 0.0)                          # (R, 256)

    h2 = jnp.dot(h1, w2_ref[...], preferred_element_type=jnp.float32)
    h2 = jnp.maximum(h2 + b2_ref[...], 0.0)                          # (R, 512)

    out = jnp.dot(h2, w3_ref[...], preferred_element_type=jnp.float32)
    o_ref[...] = (out + b3_ref[...]).astype(o_ref.dtype)             # (R, 480)


def pack_params(params):
    """One-time repack of PyTorch-convention weights into the block-diagonal
    'PACK samples per lane-row' layout. Call once, reuse across forward calls."""
    eye = jnp.eye(PACK, dtype=jnp.float32)
    return {
        "w1": jnp.kron(eye, params["w1"].T),                 # (128, 256)
        "b1": jnp.tile(params["b1"], PACK).reshape(1, -1),    # (1, 256)
        "w2": jnp.kron(eye, params["w2"].T),                  # (256, 512)
        "b2": jnp.tile(params["b2"], PACK).reshape(1, -1),    # (1, 512)
        "w3": jnp.kron(eye, params["w3"].T),                  # (512, 480)
        "b3": jnp.tile(params["b3"], PACK).reshape(1, -1),    # (1, 480)
    }


@functools.partial(jax.jit, static_argnames=("tb",))
def abalone_forward(x, packed, tb=TB_DEFAULT):
    """x: (B, 8) float32, packed: output of pack_params.
    Returns (B, NUM_CLASSES) float32 logits (PyTorch layout)."""
    assert tb % (8 * PACK) == 0, "tb must be a multiple of 128"
    B = x.shape[0]

    # Pad the batch only up to a multiple of PACK so the packed reshape is a
    # pure (free) row-major reshape.  Partial grid tiles are handled by
    # Pallas block masking, so no padding to a multiple of the tile is needed.
    B_pack = _round_up(max(B, 1), PACK)
    if B_pack != B:
        x = jnp.pad(x, ((0, B_pack - B), (0, 0)))
    rows = B_pack // PACK
    x_packed = x.reshape(rows, PACK * IN_FEATURES)        # (rows, 128), free

    # Rows of packed samples per grid step (R * PACK samples per tile).
    R = min(tb // PACK, _round_up(rows, 8))
    grid = (pl.cdiv(rows, R),)
    n_out = PACK * NUM_CLASSES                             # 480 lanes per row

    def const2d(r, c):
        return pl.BlockSpec((r, c), lambda i: (0, 0))      # VMEM-resident

    out_packed = pl.pallas_call(
        mlp_kernel,
        out_shape=jax.ShapeDtypeStruct((rows, n_out), jnp.float32),
        grid=grid,
        in_specs=[
            pl.BlockSpec((R, PACK * IN_FEATURES), lambda i: (i, 0)),  # x tile
            const2d(PACK * IN_FEATURES, PACK * H1),                   # W1 blkdiag
            const2d(1, PACK * H1),                                    # b1
            const2d(PACK * H1, PACK * H2),                            # W2 blkdiag
            const2d(1, PACK * H2),                                    # b2
            const2d(PACK * H2, n_out),                                # W3 blkdiag
            const2d(1, n_out),                                        # b3
        ],
        out_specs=pl.BlockSpec((R, n_out), lambda i: (i, 0)),
        compiler_params=pltpu.CompilerParams(
            dimension_semantics=("parallel",),
            vmem_limit_bytes=32 * 1024 * 1024,
        ),
    )(x_packed, packed["w1"], packed["b1"], packed["w2"], packed["b2"],
      packed["w3"], packed["b3"])

    # Free reshape back to natural layout; drop batch padding (no-op if B%16==0).
    out = out_packed.reshape(B_pack, NUM_CLASSES)
    return out[:B]


def init_params(key):
    """Deterministic init mimicking PyTorch nn.Linear default:
    U(-1/sqrt(fan_in), 1/sqrt(fan_in)) for weight and bias.
    Weights stored PyTorch-style as (out_features, in_features)."""
    dims = [(IN_FEATURES, H1), (H1, H2), (H2, NUM_CLASSES)]
    params = {}
    for i, (fan_in, fan_out) in enumerate(dims, start=1):
        key, kw, kb = jax.random.split(key, 3)
        bound = 1.0 / jnp.sqrt(float(fan_in))
        params[f"w{i}"] = jax.random.uniform(
            kw, (fan_out, fan_in), jnp.float32, minval=-bound, maxval=bound)
        params[f"b{i}"] = jax.random.uniform(
            kb, (fan_out,), jnp.float32, minval=-bound, maxval=bound)
    return params


def reference_forward(x, params):
    h1 = jnp.maximum(x @ params["w1"].T + params["b1"], 0.0)
    h2 = jnp.maximum(h1 @ params["w2"].T + params["b2"], 0.0)
    return h2 @ params["w3"].T + params["b3"]


if __name__ == "__main__":
    key = jax.random.PRNGKey(0)
    key, kx1, kx2 = jax.random.split(key, 3)
    params = init_params(key)
    packed = pack_params(params)   # one-time layout plumbing, outside the call

    # Small batch (not a multiple of 16 -> exercises the pad + slice path).
    batch = 8
    x = jax.random.normal(kx1, (batch, IN_FEATURES), dtype=jnp.float32)
    out = jax.block_until_ready(abalone_forward(x, packed))
    ref = reference_forward(x, params)
    assert out.shape == (batch, NUM_CLASSES)
    assert jnp.allclose(out, ref, atol=1e-5, rtol=1e-5)

    # Larger batch: multiple grid steps plus a partial (masked) last tile.
    batch2 = 300
    x2 = jax.random.normal(kx2, (batch2, IN_FEATURES), dtype=jnp.float32)
    out2 = jax.block_until_ready(abalone_forward(x2, packed, tb=128))
    ref2 = reference_forward(x2, params)
    assert out2.shape == (batch2, NUM_CLASSES)
    assert jnp.allclose(out2, ref2, atol=1e-5, rtol=1e-5)

    print("KERNEL_OK")
</pallas_src>

<mosaic_0001>
module attributes {stable_mosaic.version = 11 : i64} {
  func.func @mlp_kernel(%arg0: i32, %arg1: memref<8x128xf32, #tpu.memory_space<vmem>>, %arg2: memref<128x256xf32, #tpu.memory_space<vmem>>, %arg3: memref<1x256xf32, #tpu.memory_space<vmem>>, %arg4: memref<256x512xf32, #tpu.memory_space<vmem>>, %arg5: memref<1x512xf32, #tpu.memory_space<vmem>>, %arg6: memref<512x480xf32, #tpu.memory_space<vmem>>, %arg7: memref<1x480xf32, #tpu.memory_space<vmem>>, %arg8: memref<8x480xf32, #tpu.memory_space<vmem>>) attributes {dimension_semantics = [#tpu.dimension_semantics<parallel>], iteration_bounds = array<i64: 1>, scalar_prefetch = 0 : i64, scratch_operands = 0 : i64, tpu.core_type = #tpu.core_type<tc>, window_params = [{transform_indices = @transform_0, window_bounds = array<i64: 8, 128>}, {pipeline_mode = #tpu.pipeline_mode<synchronous>, transform_indices = @transform_1, window_bounds = array<i64: 128, 256>}, {pipeline_mode = #tpu.pipeline_mode<synchronous>, transform_indices = @transform_2, window_bounds = array<i64: 1, 256>}, {pipeline_mode = #tpu.pipeline_mode<synchronous>, transform_indices = @transform_3, window_bounds = array<i64: 256, 512>}, {pipeline_mode = #tpu.pipeline_mode<synchronous>, transform_indices = @transform_4, window_bounds = array<i64: 1, 512>}, {pipeline_mode = #tpu.pipeline_mode<synchronous>, transform_indices = @transform_5, window_bounds = array<i64: 512, 480>}, {pipeline_mode = #tpu.pipeline_mode<synchronous>, transform_indices = @transform_6, window_bounds = array<i64: 1, 480>}, {transform_indices = @transform_7, window_bounds = array<i64: 8, 480>}]} {
    %c0 = arith.constant 0 : index
    %c0_0 = arith.constant 0 : index
    %0 = vector.load %arg1[%c0, %c0_0] : memref<8x128xf32, #tpu.memory_space<vmem>>, vector<8x128xf32>
    %c0_1 = arith.constant 0 : index
    %c0_2 = arith.constant 0 : index
    %1 = vector.load %arg2[%c0_1, %c0_2] : memref<128x256xf32, #tpu.memory_space<vmem>>, vector<128x256xf32>
    %cst = arith.constant dense<0.000000e+00> : vector<8x256xf32>
    %2 = tpu.matmul %0, %1, %cst {dimension_numbers = #tpu.dot_dimension_numbers<[1], [0], [0], [1], [0, 0, 1, 1], [], []>} : vector<8x128xf32>, vector<128x256xf32>, vector<8x256xf32> -> vector<8x256xf32>
    %c0_3 = arith.constant 0 : index
    %c0_4 = arith.constant 0 : index
    %3 = vector.load %arg3[%c0_3, %c0_4] : memref<1x256xf32, #tpu.memory_space<vmem>>, vector<1x256xf32>
    %4 = vector.broadcast %3 : vector<1x256xf32> to vector<8x256xf32>
    %5 = arith.addf %2, %4 : vector<8x256xf32>
    %cst_5 = arith.constant 0.000000e+00 : f32
    %6 = vector.broadcast %cst_5 : f32 to vector<8x256xf32>
    %7 = arith.maximumf %5, %6 : vector<8x256xf32>
    %c0_6 = arith.constant 0 : index
    %c0_7 = arith.constant 0 : index
    %8 = vector.load %arg4[%c0_6, %c0_7] : memref<256x512xf32, #tpu.memory_space<vmem>>, vector<256x512xf32>
    %cst_8 = arith.constant dense<0.000000e+00> : vector<8x512xf32>
    %9 = tpu.matmul %7, %8, %cst_8 {dimension_numbers = #tpu.dot_dimension_numbers<[1], [0], [0], [1], [0, 0, 1, 1], [], []>} : vector<8x256xf32>, vector<256x512xf32>, vector<8x512xf32> -> vector<8x512xf32>
    %c0_9 = arith.constant 0 : index
    %c0_10 = arith.constant 0 : index
    %10 = vector.load %arg5[%c0_9, %c0_10] : memref<1x512xf32, #tpu.memory_space<vmem>>, vector<1x512xf32>
    %11 = vector.broadcast %10 : vector<1x512xf32> to vector<8x512xf32>
    %12 = arith.addf %9, %11 : vector<8x512xf32>
    %cst_11 = arith.constant 0.000000e+00 : f32
    %13 = vector.broadcast %cst_11 : f32 to vector<8x512xf32>
    %14 = arith.maximumf %12, %13 : vector<8x512xf32>
    %c0_12 = arith.constant 0 : index
    %c0_13 = arith.constant 0 : index
    %15 = vector.load %arg6[%c0_12, %c0_13] : memref<512x480xf32, #tpu.memory_space<vmem>>, vector<512x480xf32>
    %cst_14 = arith.constant dense<0.000000e+00> : vector<8x480xf32>
    %16 = tpu.matmul %14, %15, %cst_14 {dimension_numbers = #tpu.dot_dimension_numbers<[1], [0], [0], [1], [0, 0, 1, 1], [], []>} : vector<8x512xf32>, vector<512x480xf32>, vector<8x480xf32> -> vector<8x480xf32>
    %c0_15 = arith.constant 0 : index
    %c0_16 = arith.constant 0 : index
    %17 = vector.load %arg7[%c0_15, %c0_16] : memref<1x480xf32, #tpu.memory_space<vmem>>, vector<1x480xf32>
    %18 = vector.broadcast %17 : vector<1x480xf32> to vector<8x480xf32>
    %19 = arith.addf %16, %18 : vector<8x480xf32>
    %c0_17 = arith.constant 0 : index
    %c0_18 = arith.constant 0 : index
    %20 = vector.load %arg8[%c0_17, %c0_18] : memref<8x480xf32, #tpu.memory_space<vmem>>, vector<8x480xf32>
    tpu.vector_store %arg8[%c0_17, %c0_18], %19 {strides = array<i32>} : memref<8x480xf32, #tpu.memory_space<vmem>>, vector<8x480xf32>,
    return
  }
  func.func @transform_0(%arg0: i32) -> (i32, i32) {
    %c0_i32 = arith.constant 0 : i32
    %c0_i32_0 = arith.constant 0 : i32
    return %arg0, %c0_i32 : i32, i32
  }
  func.func @transform_1(%arg0: i32) -> (i32, i32) {
    %c0_i32 = arith.constant 0 : i32
    %c0_i32_0 = arith.constant 0 : i32
    %c0_i32_1 = arith.constant 0 : i32
    return %c0_i32, %c0_i32_0 : i32, i32
  }
  func.func @transform_2(%arg0: i32) -> (i32, i32) {
    %c0_i32 = arith.constant 0 : i32
    %c0_i32_0 = arith.constant 0 : i32
    %c0_i32_1 = arith.constant 0 : i32
    return %c0_i32, %c0_i32_0 : i32, i32
  }
  func.func @transform_3(%arg0: i32) -> (i32, i32) {
    %c0_i32 = arith.constant 0 : i32
    %c0_i32_0 = arith.constant 0 : i32
    %c0_i32_1 = arith.constant 0 : i32
    return %c0_i32, %c0_i32_0 : i32, i32
  }
  func.func @transform_4(%arg0: i32) -> (i32, i32) {
    %c0_i32 = arith.constant 0 : i32
    %c0_i32_0 = arith.constant 0 : i32
    %c0_i32_1 = arith.constant 0 : i32
    return %c0_i32, %c0_i32_0 : i32, i32
  }
  func.func @transform_5(%arg0: i32) -> (i32, i32) {
    %c0_i32 = arith.constant 0 : i32
    %c0_i32_0 = arith.constant 0 : i32
    %c0_i32_1 = arith.constant 0 : i32
    return %c0_i32, %c0_i32_0 : i32, i32
  }
  func.func @transform_6(%arg0: i32) -> (i32, i32) {
    %c0_i32 = arith.constant 0 : i32
    %c0_i32_0 = arith.constant 0 : i32
    %c0_i32_1 = arith.constant 0 : i32
    return %c0_i32, %c0_i32_0 : i32, i32
  }
  func.func @transform_7(%arg0: i32) -> (i32, i32) {
    %c0_i32 = arith.constant 0 : i32
    %c0_i32_0 = arith.constant 0 : i32
    return %arg0, %c0_i32 : i32, i32
  }
}

</mosaic_0001>

<llo_original>
// kernel: abalone_forward.1
$region0: #{abalone_forward.1}
  #allocation0 [shape = 'u32[]', space=smem, size = 0x4, offset = 0x4, fixed_abs, tag = 'smem constant byte address 0x4 - core index']
  #allocation1 [shape = 'u32[144,128]{1,0:T(1,128)}', space=vmem, size = 0x12000, scoped, tag = 'internal scratch']
  %s0 = inlined_call_operand.vmem [shape: f32[1,128], index: 0, kind: input, shape index: {}]
  %s1 = inlined_call_operand.vmem [shape: f32[128,256], index: 1, kind: input, shape index: {}]
  %s2 = inlined_call_operand.vmem [shape: f32[1,256], index: 2, kind: input, shape index: {}]
  %s3 = inlined_call_operand.vmem [shape: f32[256,512], index: 3, kind: input, shape index: {}]
  %s4 = inlined_call_operand.vmem [shape: f32[1,512], index: 4, kind: input, shape index: {}]
  %s5 = inlined_call_operand.vmem [shape: f32[512,480], index: 5, kind: input, shape index: {}]
  %s6 = inlined_call_operand.vmem [shape: f32[1,480], index: 6, kind: input, shape index: {}]
  %s7 = inlined_call_operand.vmem [shape: f32[1,480], index: 7, kind: output, shape index: {}]
  %s8 = sld [smem:[#allocation0]]
  $region68: #{abalone_forward.1} parent=0
    _
  %s10 = ssub.s32 1, %s8
  %s11 = scalar_select 0, %s10, %s8
  $region1: #{abalone_forward.1} parent=0
    #allocation2 [shape = 'u8[16384]{0}', space=vmem, size = 0x4000, scoped, tag = 'output window, operand 0, single buffered']
    // Predicated region
    $region2: #{abalone_forward.1} parent=1 // pred_check
      _
    $region3: #{abalone_forward.1} parent=1 // pred_check_branch
      %13 = sbr.rel (0) target = $region5
    $region4: #{abalone_forward.1} parent=1 // pred_region
      _
    $region5: #{abalone_forward.1} parent=1 // pred_fallthru
      _
    // Predicated region
    $region6: #{abalone_forward.1} parent=1 // pred_check
      _
    $region7: #{abalone_forward.1} parent=1 // pred_check_branch
      %15 = sbr.rel (0) target = $region9
    $region8: #{abalone_forward.1} parent=1 // pred_region
      _
    $region9: #{abalone_forward.1} parent=1 // pred_fallthru
      _
    // Predicated region
    $region10: #{abalone_forward.1} parent=1 // pred_check
      _
    $region11: #{abalone_forward.1} parent=1 // pred_check_branch
      %17 = sbr.rel (0) target = $region13
    $region12: #{abalone_forward.1} parent=1 // pred_region
      _
    $region13: #{abalone_forward.1} parent=1 // pred_fallthru
      _
    // Predicated region
    $region14: #{abalone_forward.1} parent=1 // pred_check
      _
    $region15: #{abalone_forward.1} parent=1 // pred_check_branch
      %19 = sbr.rel (0) target = $region17
    $region16: #{abalone_forward.1} parent=1 // pred_region
      _
    $region17: #{abalone_forward.1} parent=1 // pred_fallthru
      _
    // Predicated region
    $region18: #{abalone_forward.1} parent=1 // pred_check
      _
    $region19: #{abalone_forward.1} parent=1 // pred_check_branch
      %21 = sbr.rel (0) target = $region21
    $region20: #{abalone_forward.1} parent=1 // pred_region
      _
    $region21: #{abalone_forward.1} parent=1 // pred_fallthru
      _
    // Predicated region
    $region22: #{abalone_forward.1} parent=1 // pred_check
      _
    $region23: #{abalone_forward.1} parent=1 // pred_check_branch
      %23 = sbr.rel (0) target = $region25
    $region24: #{abalone_forward.1} parent=1 // pred_region
      _
    $region25: #{abalone_forward.1} parent=1 // pred_fallthru
      _
    // Predicated region
    $region26: #{abalone_forward.1} parent=1 // pred_check
      _
    $region27: #{abalone_forward.1} parent=1 // pred_check_branch
      %25 = sbr.rel (0) target = $region29
    $region28: #{abalone_forward.1} parent=1 // pred_region
      _
    $region29: #{abalone_forward.1} parent=1 // pred_fallthru
      _
    %v26 = vld [vmem:[%s0] sm:$0xff]
    %v27 = vld [vmem:[%s1] sm:$0xff]
    %v28 = vld [vmem:[%s1 + $0x8] sm:$0xff]
    %v29 = vld [vmem:[%s1 + $0x10] sm:$0xff]
    %v30 = vld [vmem:[%s1 + $0x18] sm:$0xff]
    %v31 = vld [vmem:[%s1 + $0x20] sm:$0xff]
    %v32 = vld [vmem:[%s1 + $0x28] sm:$0xff]
    %v33 = vld [vmem:[%s1 + $0x30] sm:$0xff]
    %v34 = vld [vmem:[%s1 + $0x38] sm:$0xff]
    %v35 = vld [vmem:[%s1 + $0x40] sm:$0xff]
    %v36 = vld [vmem:[%s1 + $0x48] sm:$0xff]
    %v37 = vld [vmem:[%s1 + $0x50] sm:$0xff]
    %v38 = vld [vmem:[%s1 + $0x58] sm:$0xff]
    %v39 = vld [vmem:[%s1 + $0x60] sm:$0xff]
    %v40 = vld [vmem:[%s1 + $0x68] sm:$0xff]
    %v41 = vld [vmem:[%s1 + $0x70] sm:$0xff]
    %v42 = vld [vmem:[%s1 + $0x78] sm:$0xff]
    %v43 = vld [vmem:[%s1 + $0x80] sm:$0xff]
    %v44 = vld [vmem:[%s1 + $0x88] sm:$0xff]
    %v45 = vld [vmem:[%s1 + $0x90] sm:$0xff]
    %v46 = vld [vmem:[%s1 + $0x98] sm:$0xff]
    %v47 = vld [vmem:[%s1 + $0xa0] sm:$0xff]
    %v48 = vld [vmem:[%s1 + $0xa8] sm:$0xff]
    %v49 = vld [vmem:[%s1 + $0xb0] sm:$0xff]
    %v50 = vld [vmem:[%s1 + $0xb8] sm:$0xff]
    %v51 = vld [vmem:[%s1 + $0xc0] sm:$0xff]
    %v52 = vld [vmem:[%s1 + $0xc8] sm:$0xff]
    %v53 = vld [vmem:[%s1 + $0xd0] sm:$0xff]
    %v54 = vld [vmem:[%s1 + $0xd8] sm:$0xff]
    %v55 = vld [vmem:[%s1 + $0xe0] sm:$0xff]
    %v56 = vld [vmem:[%s1 + $0xe8] sm:$0xff]
    %v57 = vld [vmem:[%s1 + $0xf0] sm:$0xff]
    %v58 = vld [vmem:[%s1 + $0xf8] sm:$0xff]
    %v59 = vld [vmem:[%s2] sm:$0x3]
    %v61 = vlaneseq
    %v62 = vshrl.u32 %v61, 7
    %v63 = vsub.s32 0, %v62
    %v64 = vrot.slane %v59, %v63
    %v65 = vlaneseq
    %v66 = vshrl.u32 %v65, 7
    %v67 = vsub.s32 1, %v66
    %v68 = vrot.slane %v59, %v67
    %71 = vmatprep.subr.mxu0 %v28
    %72 = vmatpush1.msra.mxu0 %v27
    %73 = vmatprep.subr.mxu0 %v30
    %74 = vmatpush1.msra.mxu0 %v29
    %75 = vmatprep.subr.mxu0 %v32
    %76 = vmatpush1.msra.mxu0 %v31
    %77 = vmatprep.subr.mxu0 %v34
    %78 = vmatpush1.msra.mxu0 %v33
    %79 = vmatprep.subr.mxu0 %v36
    %80 = vmatpush1.msra.mxu0 %v35
    %81 = vmatprep.subr.mxu0 %v38
    %82 = vmatpush1.msra.mxu0 %v37
    %83 = vmatprep.subr.mxu0 %v40
    %84 = vmatpush1.msra.mxu0 %v39
    %85 = vmatprep.subr.mxu0 %v42
    %86 = vmatpush1.msra.mxu0 %v41
    %87 = vmatprep.subr.mxu0 %v44
    %88 = vmatpush1.msra.mxu0 %v43
    %89 = vmatprep.subr.mxu0 %v46
    %90 = vmatpush1.msra.mxu0 %v45
    %91 = vmatprep.subr.mxu0 %v48
    %92 = vmatpush1.msra.mxu0 %v47
    %93 = vmatprep.subr.mxu0 %v50
    %94 = vmatpush1.msra.mxu0 %v49
    %95 = vmatprep.subr.mxu0 %v52
    %96 = vmatpush1.msra.mxu0 %v51
    %97 = vmatprep.subr.mxu0 %v54
    %98 = vmatpush1.msra.mxu0 %v53
    %99 = vmatprep.subr.mxu0 %v56
    %100 = vmatpush1.msra.mxu0 %v55
    %101 = vmatprep.subr.mxu0 %v58
    %102 = vmatpush1.msra.mxu0 %v57
    %103 = vmatprep.subr.mxu0 0.0
    %104 = vmatpush1.msra.mxu0 0.0
    %105 = vmatprep.subr.mxu0 0.0
    %106 = vmatpush1.msra.mxu0 0.0
    %107 = vmatprep.subr.mxu0 0.0
    %108 = vmatpush1.msra.mxu0 0.0
    %109 = vmatprep.subr.mxu0 0.0
    %110 = vmatpush1.msra.mxu0 0.0
    %111 = vmatprep.subr.mxu0 0.0
    %112 = vmatpush1.msra.mxu0 0.0
    %113 = vmatprep.subr.mxu0 0.0
    %114 = vmatpush1.msra.mxu0 0.0
    %115 = vmatprep.subr.mxu0 0.0
    %116 = vmatpush1.msra.mxu0 0.0
    %117 = vmatprep.subr.mxu0 0.0
    %118 = vmatpush1.msra.mxu0 0.0
    %119 = vmatprep.subr.mxu0 0.0
    %120 = vmatpush1.msra.mxu0 0.0
    %121 = vmatprep.subr.mxu0 0.0
    %122 = vmatpush1.msra.mxu0 0.0
    %123 = vmatprep.subr.mxu0 0.0
    %124 = vmatpush1.msra.mxu0 0.0
    %125 = vmatprep.subr.mxu0 0.0
    %126 = vmatpush1.msra.mxu0 0.0
    %127 = vmatprep.subr.mxu0 0.0
    %128 = vmatpush1.msra.mxu0 0.0
    %129 = vmatprep.subr.mxu0 0.0
    %130 = vmatpush1.msra.mxu0 0.0
    %131 = vmatprep.subr.mxu0 0.0
    %132 = vmatpush1.msra.mxu0 0.0
    %133 = vmatprep.subr.mxu0 0.0
    %134 = vmatpush1.msra.mxu0 0.0
    %135 = vmatprep.mubr.f32.mxu0 0.0
    %136 = vmatmul.mubr.f32.gmra.mrb[0].mxu0 %v26
    %v137 = vpop.f32.mrb[0].mxu0
    %v138 = vadd.f32 %v64, %v137
    %v139 = vpop.f32.mrb[0].mxu0
    %v140 = vadd.f32 %v68, %v139
    %141 = vdwg.mxu0
    %v142 = vmax.f32 %v138, 0.0
    %v143 = vmax.f32 %v140, 0.0
    %v144 = vld [vmem:[%s3] sm:$0xff]
    %v145 = vld [vmem:[%s3 + $0x8] sm:$0xff]
    %v146 = vld [vmem:[%s3 + $0x10] sm:$0xff]
    %v147 = vld [vmem:[%s3 + $0x18] sm:$0xff]
    %v148 = vld [vmem:[%s3 + $0x20] sm:$0xff]
    %v149 = vld [vmem:[%s3 + $0x28] sm:$0xff]
    %v150 = vld [vmem:[%s3 + $0x30] sm:$0xff]
    %v151 = vld [vmem:[%s3 + $0x38] sm:$0xff]
    %v152 = vld [vmem:[%s3 + $0x40] sm:$0xff]
    %v153 = vld [vmem:[%s3 + $0x48] sm:$0xff]
    %v154 = vld [vmem:[%s3 + $0x50] sm:$0xff]
    %v155 = vld [vmem:[%s3 + $0x58] sm:$0xff]
    %v156 = vld [vmem:[%s3 + $0x60] sm:$0xff]
    %v157 = vld [vmem:[%s3 + $0x68] sm:$0xff]
    %v158 = vld [vmem:[%s3 + $0x70] sm:$0xff]
    %v159 = vld [vmem:[%s3 + $0x78] sm:$0xff]
    %v160 = vld [vmem:[%s3 + $0x80] sm:$0xff]
    %v161 = vld [vmem:[%s3 + $0x88] sm:$0xff]
    %v162 = vld [vmem:[%s3 + $0x90] sm:$0xff]
    %v163 = vld [vmem:[%s3 + $0x98] sm:$0xff]
    %v164 = vld [vmem:[%s3 + $0xa0] sm:$0xff]
    %v165 = vld [vmem:[%s3 + $0xa8] sm:$0xff]
    %v166 = vld [vmem:[%s3 + $0xb0] sm:$0xff]
    %v167 = vld [vmem:[%s3 + $0xb8] sm:$0xff]
    %v168 = vld [vmem:[%s3 + $0xc0] sm:$0xff]
    %v169 = vld [vmem:[%s3 + $0xc8] sm:$0xff]
    %v170 = vld [vmem:[%s3 + $0xd0] sm:$0xff]
    %v171 = vld [vmem:[%s3 + $0xd8] sm:$0xff]
    %v172 = vld [vmem:[%s3 + $0xe0] sm:$0xff]
    %v173 = vld [vmem:[%s3 + $0xe8] sm:$0xff]
    %v174 = vld [vmem:[%s3 + $0xf0] sm:$0xff]
    %v175 = vld [vmem:[%s3 + $0xf8] sm:$0xff]
    %v176 = vld [vmem:[%s3 + $0x100] sm:$0xff]
    %v177 = vld [vmem:[%s3 + $0x108] sm:$0xff]
    %v178 = vld [vmem:[%s3 + $0x110] sm:$0xff]
    %v179 = vld [vmem:[%s3 + $0x118] sm:$0xff]
    %v180 = vld [vmem:[%s3 + $0x120] sm:$0xff]
    %v181 = vld [vmem:[%s3 + $0x128] sm:$0xff]
    %v182 = vld [vmem:[%s3 + $0x130] sm:$0xff]
    %v183 = vld [vmem:[%s3 + $0x138] sm:$0xff]
    %v184 = vld [vmem:[%s3 + $0x140] sm:$0xff]
    %v185 = vld [vmem:[%s3 + $0x148] sm:$0xff]
    %v186 = vld [vmem:[%s3 + $0x150] sm:$0xff]
    %v187 = vld [vmem:[%s3 + $0x158] sm:$0xff]
    %v188 = vld [vmem:[%s3 + $0x160] sm:$0xff]
    %v189 = vld [vmem:[%s3 + $0x168] sm:$0xff]
    %v190 = vld [vmem:[%s3 + $0x170] sm:$0xff]
    %v191 = vld [vmem:[%s3 + $0x178] sm:$0xff]
    %v192 = vld [vmem:[%s3 + $0x180] sm:$0xff]
    %v193 = vld [vmem:[%s3 + $0x188] sm:$0xff]
    %v194 = vld [vmem:[%s3 + $0x190] sm:$0xff]
    %v195 = vld [vmem:[%s3 + $0x198] sm:$0xff]
    %v196 = vld [vmem:[%s3 + $0x1a0] sm:$0xff]
    %v197 = vld [vmem:[%s3 + $0x1a8] sm:$0xff]
    %v198 = vld [vmem:[%s3 + $0x1b0] sm:$0xff]
    %v199 = vld [vmem:[%s3 + $0x1b8] sm:$0xff]
    %v200 = vld [vmem:[%s3 + $0x1c0] sm:$0xff]
    %v201 = vld [vmem:[%s3 + $0x1c8] sm:$0xff]
    %v202 = vld [vmem:[%s3 + $0x1d0] sm:$0xff]
    %v203 = vld [vmem:[%s3 + $0x1d8] sm:$0xff]
    %v204 = vld [vmem:[%s3 + $0x1e0] sm:$0xff]
    %v205 = vld [vmem:[%s3 + $0x1e8] sm:$0xff]
    %v206 = vld [vmem:[%s3 + $0x1f0] sm:$0xff]
    %v207 = vld [vmem:[%s3 + $0x1f8] sm:$0xff]
    %v208 = vld [vmem:[%s3 + $0x200] sm:$0xff]
    %v209 = vld [vmem:[%s3 + $0x208] sm:$0xff]
    %v210 = vld [vmem:[%s3 + $0x210] sm:$0xff]
    %v211 = vld [vmem:[%s3 + $0x218] sm:$0xff]
    %v212 = vld [vmem:[%s3 + $0x220] sm:$0xff]
    %v213 = vld [vmem:[%s3 + $0x228] sm:$0xff]
    %v214 = vld [vmem:[%s3 + $0x230] sm:$0xff]
    %v215 = vld [vmem:[%s3 + $0x238] sm:$0xff]
    %v216 = vld [vmem:[%s3 + $0x240] sm:$0xff]
    %v217 = vld [vmem:[%s3 + $0x248] sm:$0xff]
    %v218 = vld [vmem:[%s3 + $0x250] sm:$0xff]
    %v219 = vld [vmem:[%s3 + $0x258] sm:$0xff]
    %v220 = vld [vmem:[%s3 + $0x260] sm:$0xff]
    %v221 = vld [vmem:[%s3 + $0x268] sm:$0xff]
    %v222 = vld [vmem:[%s3 + $0x270] sm:$0xff]
    %v223 = vld [vmem:[%s3 + $0x278] sm:$0xff]
    %v224 = vld [vmem:[%s3 + $0x280] sm:$0xff]
    %v225 = vld [vmem:[%s3 + $0x288] sm:$0xff]
    %v226 = vld [vmem:[%s3 + $0x290] sm:$0xff]
    %v227 = vld [vmem:[%s3 + $0x298] sm:$0xff]
    %v228 = vld [vmem:[%s3 + $0x2a0] sm:$0xff]
    %v229 = vld [vmem:[%s3 + $0x2a8] sm:$0xff]
    %v230 = vld [vmem:[%s3 + $0x2b0] sm:$0xff]
    %v231 = vld [vmem:[%s3 + $0x2b8] sm:$0xff]
    %v232 = vld [vmem:[%s3 + $0x2c0] sm:$0xff]
    %v233 = vld [vmem:[%s3 + $0x2c8] sm:$0xff]
    %v234 = vld [vmem:[%s3 + $0x2d0] sm:$0xff]
    %v235 = vld [vmem:[%s3 + $0x2d8] sm:$0xff]
    %v236 = vld [vmem:[%s3 + $0x2e0] sm:$0xff]
    %v237 = vld [vmem:[%s3 + $0x2e8] sm:$0xff]
    %v238 = vld [vmem:[%s3 + $0x2f0] sm:$0xff]
    %v239 = vld [vmem:[%s3 + $0x2f8] sm:$0xff]
    %v240 = vld [vmem:[%s3 + $0x300] sm:$0xff]
    %v241 = vld [vmem:[%s3 + $0x308] sm:$0xff]
    %v242 = vld [vmem:[%s3 + $0x310] sm:$0xff]
    %v243 = vld [vmem:[%s3 + $0x318] sm:$0xff]
    %v244 = vld [vmem:[%s3 + $0x320] sm:$0xff]
    %v245 = vld [vmem:[%s3 + $0x328] sm:$0xff]
    %v246 = vld [vmem:[%s3 + $0x330] sm:$0xff]
    %v247 = vld [vmem:[%s3 + $0x338] sm:$0xff]
    %v248 = vld [vmem:[%s3 + $0x340] sm:$0xff]
    %v249 = vld [vmem:[%s3 + $0x348] sm:$0xff]
    %v250 = vld [vmem:[%s3 + $0x350] sm:$0xff]
    %v251 = vld [vmem:[%s3 + $0x358] sm:$0xff]
    %v252 = vld [vmem:[%s3 + $0x360] sm:$0xff]
    %v253 = vld [vmem:[%s3 + $0x368] sm:$0xff]
    %v254 = vld [vmem:[%s3 + $0x370] sm:$0xff]
    %v255 = vld [vmem:[%s3 + $0x378] sm:$0xff]
    %v256 = vld [vmem:[%s3 + $0x380] sm:$0xff]
    %v257 = vld [vmem:[%s3 + $0x388] sm:$0xff]
    %v258 = vld [vmem:[%s3 + $0x390] sm:$0xff]
    %v259 = vld [vmem:[%s3 + $0x398] sm:$0xff]
    %v260 = vld [vmem:[%s3 + $0x3a0] sm:$0xff]
    %v261 = vld [vmem:[%s3 + $0x3a8] sm:$0xff]
    %v262 = vld [vmem:[%s3 + $0x3b0] sm:$0xff]
    %v263 = vld [vmem:[%s3 + $0x3b8] sm:$0xff]
    %v264 = vld [vmem:[%s3 + $0x3c0] sm:$0xff]
    %v265 = vld [vmem:[%s3 + $0x3c8] sm:$0xff]
    %v266 = vld [vmem:[%s3 + $0x3d0] sm:$0xff]
    %v267 = vld [vmem:[%s3 + $0x3d8] sm:$0xff]
    %v268 = vld [vmem:[%s3 + $0x3e0] sm:$0xff]
    %v269 = vld [vmem:[%s3 + $0x3e8] sm:$0xff]
    %v270 = vld [vmem:[%s3 + $0x3f0] sm:$0xff]
    %v271 = vld [vmem:[%s3 + $0x3f8] sm:$0xff]
    %v272 = vld [vmem:[%s4] sm:$0xf]
    %v274 = vlaneseq
    %v275 = vshrl.u32 %v274, 7
    %v276 = vsub.s32 0, %v275
    %v277 = vrot.slane %v272, %v276
    %v278 = vlaneseq
    %v279 = vshrl.u32 %v278, 7
    %v280 = vsub.s32 1, %v279
    %v281 = vrot.slane %v272, %v280
    %v282 = vlaneseq
    %v283 = vshrl.u32 %v282, 7
    %v284 = vsub.s32 2, %v283
    %v285 = vrot.slane %v272, %v284
    %v286 = vlaneseq
    %v287 = vshrl.u32 %v286, 7
    %v288 = vsub.s32 3, %v287
    %v289 = vrot.slane %v272, %v288
    %294 = vmatprep.subr.mxu0 %v145
    %295 = vmatpush1.msra.mxu0 %v144
    %296 = vmatprep.subr.mxu0 %v149
    %297 = vmatpush1.msra.mxu0 %v148
    %298 = vmatprep.subr.mxu0 %v153
    %299 = vmatpush1.msra.mxu0 %v152
    %300 = vmatprep.subr.mxu0 %v157
    %301 = vmatpush1.msra.mxu0 %v156
    %302 = vmatprep.subr.mxu0 %v161
    %303 = vmatpush1.msra.mxu0 %v160
    %304 = vmatprep.subr.mxu0 %v165
    %305 = vmatpush1.msra.mxu0 %v164
    %306 = vmatprep.subr.mxu0 %v169
    %307 = vmatpush1.msra.mxu0 %v168
    %308 = vmatprep.subr.mxu0 %v173
    %309 = vmatpush1.msra.mxu0 %v172
    %310 = vmatprep.subr.mxu0 %v177
    %311 = vmatpush1.msra.mxu0 %v176
    %312 = vmatprep.subr.mxu0 %v181
    %313 = vmatpush1.msra.mxu0 %v180
    %314 = vmatprep.subr.mxu0 %v185
    %315 = vmatpush1.msra.mxu0 %v184
    %316 = vmatprep.subr.mxu0 %v189
    %317 = vmatpush1.msra.mxu0 %v188
    %318 = vmatprep.subr.mxu0 %v193
    %319 = vmatpush1.msra.mxu0 %v192
    %320 = vmatprep.subr.mxu0 %v197
    %321 = vmatpush1.msra.mxu0 %v196
    %322 = vmatprep.subr.mxu0 %v201
    %323 = vmatpush1.msra.mxu0 %v200
    %324 = vmatprep.subr.mxu0 %v205
    %325 = vmatpush1.msra.mxu0 %v204
    %326 = vmatprep.subr.mxu0 %v209
    %327 = vmatpush1.msra.mxu0 %v208
    %328 = vmatprep.subr.mxu0 %v213
    %329 = vmatpush1.msra.mxu0 %v212
    %330 = vmatprep.subr.mxu0 %v217
    %331 = vmatpush1.msra.mxu0 %v216
    %332 = vmatprep.subr.mxu0 %v221
    %333 = vmatpush1.msra.mxu0 %v220
    %334 = vmatprep.subr.mxu0 %v225
    %335 = vmatpush1.msra.mxu0 %v224
    %336 = vmatprep.subr.mxu0 %v229
    %337 = vmatpush1.msra.mxu0 %v228
    %338 = vmatprep.subr.mxu0 %v233
    %339 = vmatpush1.msra.mxu0 %v232
    %340 = vmatprep.subr.mxu0 %v237
    %341 = vmatpush1.msra.mxu0 %v236
    %342 = vmatprep.subr.mxu0 %v241
    %343 = vmatpush1.msra.mxu0 %v240
    %344 = vmatprep.subr.mxu0 %v245
    %345 = vmatpush1.msra.mxu0 %v244
    %346 = vmatprep.subr.mxu0 %v249
    %347 = vmatpush1.msra.mxu0 %v248
    %348 = vmatprep.subr.mxu0 %v253
    %349 = vmatpush1.msra.mxu0 %v252
    %350 = vmatprep.subr.mxu0 %v257
    %351 = vmatpush1.msra.mxu0 %v256
    %352 = vmatprep.subr.mxu0 %v261
    %353 = vmatpush1.msra.mxu0 %v260
    %354 = vmatprep.subr.mxu0 %v265
    %355 = vmatpush1.msra.mxu0 %v264
    %356 = vmatprep.subr.mxu0 %v269
    %357 = vmatpush1.msra.mxu0 %v268
    %358 = vmatprep.mubr.f32.mxu0 %v143
    %359 = vmatmul.mubr.f32.gmra.mrb[0].mxu0 %v142
    %v360 = vpop.f32.mrb[0].mxu0
    %v361 = vadd.f32 %v277, %v360
    %v362 = vpop.f32.mrb[0].mxu0
    %v363 = vadd.f32 %v281, %v362
    %364 = vdwg.mxu0
    %365 = vmatprep.subr.mxu0 %v147
    %366 = vmatpush1.msra.mxu0 %v146
    %367 = vmatprep.subr.mxu0 %v151
    %368 = vmatpush1.msra.mxu0 %v150
    %369 = vmatprep.subr.mxu0 %v155
    %370 = vmatpush1.msra.mxu0 %v154
    %371 = vmatprep.subr.mxu0 %v159
    %372 = vmatpush1.msra.mxu0 %v158
    %373 = vmatprep.subr.mxu0 %v163
    %374 = vmatpush1.msra.mxu0 %v162
    %375 = vmatprep.subr.mxu0 %v167
    %376 = vmatpush1.msra.mxu0 %v166
    %377 = vmatprep.subr.mxu0 %v171
    %378 = vmatpush1.msra.mxu0 %v170
    %379 = vmatprep.subr.mxu0 %v175
    %380 = vmatpush1.msra.mxu0 %v174
    %381 = vmatprep.subr.mxu0 %v179
    %382 = vmatpush1.msra.mxu0 %v178
    %383 = vmatprep.subr.mxu0 %v183
    %384 = vmatpush1.msra.mxu0 %v182
    %385 = vmatprep.subr.mxu0 %v187
    %386 = vmatpush1.msra.mxu0 %v186
    %387 = vmatprep.subr.mxu0 %v191
    %388 = vmatpush1.msra.mxu0 %v190
    %389 = vmatprep.subr.mxu0 %v195
    %390 = vmatpush1.msra.mxu0 %v194
    %391 = vmatprep.subr.mxu0 %v199
    %392 = vmatpush1.msra.mxu0 %v198
    %393 = vmatprep.subr.mxu0 %v203
    %394 = vmatpush1.msra.mxu0 %v202
    %395 = vmatprep.subr.mxu0 %v207
    %396 = vmatpush1.msra.mxu0 %v206
    %397 = vmatprep.subr.mxu0 %v211
    %398 = vmatpush1.msra.mxu0 %v210
    %399 = vmatprep.subr.mxu0 %v215
    %400 = vmatpush1.msra.mxu0 %v214
    %401 = vmatprep.subr.mxu0 %v219
    %402 = vmatpush1.msra.mxu0 %v218
    %403 = vmatprep.subr.mxu0 %v223
    %404 = vmatpush1.msra.mxu0 %v222
    %405 = vmatprep.subr.mxu0 %v227
    %406 = vmatpush1.msra.mxu0 %v226
    %407 = vmatprep.subr.mxu0 %v231
    %408 = vmatpush1.msra.mxu0 %v230
    %409 = vmatprep.subr.mxu0 %v235
    %410 = vmatpush1.msra.mxu0 %v234
    %411 = vmatprep.subr.mxu0 %v239
    %412 = vmatpush1.msra.mxu0 %v238
    %413 = vmatprep.subr.mxu0 %v243
    %414 = vmatpush1.msra.mxu0 %v242
    %415 = vmatprep.subr.mxu0 %v247
    %416 = vmatpush1.msra.mxu0 %v246
    %417 = vmatprep.subr.mxu0 %v251
    %418 = vmatpush1.msra.mxu0 %v250
    %419 = vmatprep.subr.mxu0 %v255
    %420 = vmatpush1.msra.mxu0 %v254
    %421 = vmatprep.subr.mxu0 %v259
    %422 = vmatpush1.msra.mxu0 %v258
    %423 = vmatprep.subr.mxu0 %v263
    %424 = vmatpush1.msra.mxu0 %v262
    %425 = vmatprep.subr.mxu0 %v267
    %426 = vmatpush1.msra.mxu0 %v266
    %427 = vmatprep.subr.mxu0 %v271
    %428 = vmatpush1.msra.mxu0 %v270
    %429 = vmatprep.mubr.f32.mxu0 %v143
    %430 = vmatmul.mubr.f32.gmra.mrb[0].mxu0 %v142
    %v431 = vpop.f32.mrb[0].mxu0
    %v432 = vadd.f32 %v285, %v431
    %v433 = vpop.f32.mrb[0].mxu0
    %v434 = vadd.f32 %v289, %v433
    %435 = vdwg.mxu0
    %v436 = vmax.f32 %v361, 0.0
    %v437 = vmax.f32 %v363, 0.0
    %v438 = vmax.f32 %v432, 0.0
    %v439 = vmax.f32 %v434, 0.0
    %v440 = vld [vmem:[%s5] sm:$0xff]
    %v441 = vld [vmem:[%s5 + $0x8] sm:$0xff]
    %v442 = vld [vmem:[%s5 + $0x10] sm:$0xff]
    %v443 = vld [vmem:[%s5 + $0x18] sm:$0xff]
    %v444 = vld [vmem:[%s5 + $0x20] sm:$0xff]
    %v445 = vld [vmem:[%s5 + $0x28] sm:$0xff]
    %v446 = vld [vmem:[%s5 + $0x30] sm:$0xff]
    %v447 = vld [vmem:[%s5 + $0x38] sm:$0xff]
    %v448 = vld [vmem:[%s5 + $0x40] sm:$0xff]
    %v449 = vld [vmem:[%s5 + $0x48] sm:$0xff]
    %v450 = vld [vmem:[%s5 + $0x50] sm:$0xff]
    %v451 = vld [vmem:[%s5 + $0x58] sm:$0xff]
    %v452 = vld [vmem:[%s5 + $0x60] sm:$0xff]
    %v453 = vld [vmem:[%s5 + $0x68] sm:$0xff]
    %v454 = vld [vmem:[%s5 + $0x70] sm:$0xff]
    %v455 = vld [vmem:[%s5 + $0x78] sm:$0xff]
    %v456 = vld [vmem:[%s5 + $0x80] sm:$0xff]
    %v457 = vld [vmem:[%s5 + $0x88] sm:$0xff]
    %v458 = vld [vmem:[%s5 + $0x90] sm:$0xff]
    %v459 = vld [vmem:[%s5 + $0x98] sm:$0xff]
    %v460 = vld [vmem:[%s5 + $0xa0] sm:$0xff]
    %v461 = vld [vmem:[%s5 + $0xa8] sm:$0xff]
    %v462 = vld [vmem:[%s5 + $0xb0] sm:$0xff]
    %v463 = vld [vmem:[%s5 + $0xb8] sm:$0xff]
    %v464 = vld [vmem:[%s5 + $0xc0] sm:$0xff]
    %v465 = vld [vmem:[%s5 + $0xc8] sm:$0xff]
    %v466 = vld [vmem:[%s5 + $0xd0] sm:$0xff]
    %v467 = vld [vmem:[%s5 + $0xd8] sm:$0xff]
    %v468 = vld [vmem:[%s5 + $0xe0] sm:$0xff]
    %v469 = vld [vmem:[%s5 + $0xe8] sm:$0xff]
    %v470 = vld [vmem:[%s5 + $0xf0] sm:$0xff]
    %v471 = vld [vmem:[%s5 + $0xf8] sm:$0xff]
    %v472 = vld [vmem:[%s5 + $0x100] sm:$0xff]
    %v473 = vld [vmem:[%s5 + $0x108] sm:$0xff]
    %v474 = vld [vmem:[%s5 + $0x110] sm:$0xff]
    %v475 = vld [vmem:[%s5 + $0x118] sm:$0xff]
    %v476 = vld [vmem:[%s5 + $0x120] sm:$0xff]
    %v477 = vld [vmem:[%s5 + $0x128] sm:$0xff]
    %v478 = vld [vmem:[%s5 + $0x130] sm:$0xff]
    %v479 = vld [vmem:[%s5 + $0x138] sm:$0xff]
    %v480 = vld [vmem:[%s5 + $0x140] sm:$0xff]
    %v481 = vld [vmem:[%s5 + $0x148] sm:$0xff]
    %v482 = vld [vmem:[%s5 + $0x150] sm:$0xff]
    %v483 = vld [vmem:[%s5 + $0x158] sm:$0xff]
    %v484 = vld [vmem:[%s5 + $0x160] sm:$0xff]
    %v485 = vld [vmem:[%s5 + $0x168] sm:$0xff]
    %v486 = vld [vmem:[%s5 + $0x170] sm:$0xff]
    %v487 = vld [vmem:[%s5 + $0x178] sm:$0xff]
    %v488 = vld [vmem:[%s5 + $0x180] sm:$0xff]
    %v489 = vld [vmem:[%s5 + $0x188] sm:$0xff]
    %v490 = vld [vmem:[%s5 + $0x190] sm:$0xff]
    %v491 = vld [vmem:[%s5 + $0x198] sm:$0xff]
    %v492 = vld [vmem:[%s5 + $0x1a0] sm:$0xff]
    %v493 = vld [vmem:[%s5 + $0x1a8] sm:$0xff]
    %v494 = vld [vmem:[%s5 + $0x1b0] sm:$0xff]
    %v495 = vld [vmem:[%s5 + $0x1b8] sm:$0xff]
    %v496 = vld [vmem:[%s5 + $0x1c0] sm:$0xff]
    %v497 = vld [vmem:[%s5 + $0x1c8] sm:$0xff]
    %v498 = vld [vmem:[%s5 + $0x1d0] sm:$0xff]
    %v499 = vld [vmem:[%s5 + $0x1d8] sm:$0xff]
    %v500 = vld [vmem:[%s5 + $0x1e0] sm:$0xff]
    %v501 = vld [vmem:[%s5 + $0x1e8] sm:$0xff]
    %v502 = vld [vmem:[%s5 + $0x1f0] sm:$0xff]
    %v503 = vld [vmem:[%s5 + $0x1f8] sm:$0xff]
    %v504 = vld [vmem:[%s5 + $0x200] sm:$0xff]
    %v505 = vld [vmem:[%s5 + $0x208] sm:$0xff]
    %v506 = vld [vmem:[%s5 + $0x210] sm:$0xff]
    %v507 = vld [vmem:[%s5 + $0x218] sm:$0xff]
    %v508 = vld [vmem:[%s5 + $0x220] sm:$0xff]
    %v509 = vld [vmem:[%s5 + $0x228] sm:$0xff]
    %v510 = vld [vmem:[%s5 + $0x230] sm:$0xff]
    %v511 = vld [vmem:[%s5 + $0x238] sm:$0xff]
    %v512 = vld [vmem:[%s5 + $0x240] sm:$0xff]
    %v513 = vld [vmem:[%s5 + $0x248] sm:$0xff]
    %v514 = vld [vmem:[%s5 + $0x250] sm:$0xff]
    %v515 = vld [vmem:[%s5 + $0x258] sm:$0xff]
    %v516 = vld [vmem:[%s5 + $0x260] sm:$0xff]
    %v517 = vld [vmem:[%s5 + $0x268] sm:$0xff]
    %v518 = vld [vmem:[%s5 + $0x270] sm:$0xff]
    %v519 = vld [vmem:[%s5 + $0x278] sm:$0xff]
    %v520 = vld [vmem:[%s5 + $0x280] sm:$0xff]
    %v521 = vld [vmem:[%s5 + $0x288] sm:$0xff]
    %v522 = vld [vmem:[%s5 + $0x290] sm:$0xff]
    %v523 = vld [vmem:[%s5 + $0x298] sm:$0xff]
    %v524 = vld [vmem:[%s5 + $0x2a0] sm:$0xff]
    %v525 = vld [vmem:[%s5 + $0x2a8] sm:$0xff]
    %v526 = vld [vmem:[%s5 + $0x2b0] sm:$0xff]
    %v527 = vld [vmem:[%s5 + $0x2b8] sm:$0xff]
    %v528 = vld [vmem:[%s5 + $0x2c0] sm:$0xff]
    %v529 = vld [vmem:[%s5 + $0x2c8] sm:$0xff]
    %v530 = vld [vmem:[%s5 + $0x2d0] sm:$0xff]
    %v531 = vld [vmem:[%s5 + $0x2d8] sm:$0xff]
    %v532 = vld [vmem:[%s5 + $0x2e0] sm:$0xff]
    %v533 = vld [vmem:[%s5 + $0x2e8] sm:$0xff]
    %v534 = vld [vmem:[%s5 + $0x2f0] sm:$0xff]
    %v535 = vld [vmem:[%s5 + $0x2f8] sm:$0xff]
    %v536 = vld [vmem:[%s5 + $0x300] sm:$0xff]
    %v537 = vld [vmem:[%s5 + $0x308] sm:$0xff]
    %v538 = vld [vmem:[%s5 + $0x310] sm:$0xff]
    %v539 = vld [vmem:[%s5 + $0x318] sm:$0xff]
    %v540 = vld [vmem:[%s5 + $0x320] sm:$0xff]
    %v541 = vld [vmem:[%s5 + $0x328] sm:$0xff]
    %v542 = vld [vmem:[%s5 + $0x330] sm:$0xff]
    %v543 = vld [vmem:[%s5 + $0x338] sm:$0xff]
    %v544 = vld [vmem:[%s5 + $0x340] sm:$0xff]
    %v545 = vld [vmem:[%s5 + $0x348] sm:$0xff]
    %v546 = vld [vmem:[%s5 + $0x350] sm:$0xff]
    %v547 = vld [vmem:[%s5 + $0x358] sm:$0xff]
    %v548 = vld [vmem:[%s5 + $0x360] sm:$0xff]
    %v549 = vld [vmem:[%s5 + $0x368] sm:$0xff]
    %v550 = vld [vmem:[%s5 + $0x370] sm:$0xff]
    %v551 = vld [vmem:[%s5 + $0x378] sm:$0xff]
    %v552 = vld [vmem:[%s5 + $0x380] sm:$0xff]
    %v553 = vld [vmem:[%s5 + $0x388] sm:$0xff]
    %v554 = vld [vmem:[%s5 + $0x390] sm:$0xff]
    %v555 = vld [vmem:[%s5 + $0x398] sm:$0xff]
    %v556 = vld [vmem:[%s5 + $0x3a0] sm:$0xff]
    %v557 = vld [vmem:[%s5 + $0x3a8] sm:$0xff]
    %v558 = vld [vmem:[%s5 + $0x3b0] sm:$0xff]
    %v559 = vld [vmem:[%s5 + $0x3b8] sm:$0xff]
    %v560 = vld [vmem:[%s5 + $0x3c0] sm:$0xff]
    %v561 = vld [vmem:[%s5 + $0x3c8] sm:$0xff]
    %v562 = vld [vmem:[%s5 + $0x3d0] sm:$0xff]
    %v563 = vld [vmem:[%s5 + $0x3d8] sm:$0xff]
    %v564 = vld [vmem:[%s5 + $0x3e0] sm:$0xff]
    %v565 = vld [vmem:[%s5 + $0x3e8] sm:$0xff]
    %v566 = vld [vmem:[%s5 + $0x3f0] sm:$0xff]
    %v567 = vld [vmem:[%s5 + $0x3f8] sm:$0xff]
    %v568 = vld [vmem:[%s5 + $0x400] sm:$0xff]
    %v569 = vld [vmem:[%s5 + $0x408] sm:$0xff]
    %v570 = vld [vmem:[%s5 + $0x410] sm:$0xff]
    %v571 = vld [vmem:[%s5 + $0x418] sm:$0xff]
    %v572 = vld [vmem:[%s5 + $0x420] sm:$0xff]
    %v573 = vld [vmem:[%s5 + $0x428] sm:$0xff]
    %v574 = vld [vmem:[%s5 + $0x430] sm:$0xff]
    %v575 = vld [vmem:[%s5 + $0x438] sm:$0xff]
    %v576 = vld [vmem:[%s5 + $0x440] sm:$0xff]
    %v577 = vld [vmem:[%s5 + $0x448] sm:$0xff]
    %v578 = vld [vmem:[%s5 + $0x450] sm:$0xff]
    %v579 = vld [vmem:[%s5 + $0x458] sm:$0xff]
    %v580 = vld [vmem:[%s5 + $0x460] sm:$0xff]
    %v581 = vld [vmem:[%s5 + $0x468] sm:$0xff]
    %v582 = vld [vmem:[%s5 + $0x470] sm:$0xff]
    %v583 = vld [vmem:[%s5 + $0x478] sm:$0xff]
    %v584 = vld [vmem:[%s5 + $0x480] sm:$0xff]
    %v585 = vld [vmem:[%s5 + $0x488] sm:$0xff]
    %v586 = vld [vmem:[%s5 + $0x490] sm:$0xff]
    %v587 = vld [vmem:[%s5 + $0x498] sm:$0xff]
    %v588 = vld [vmem:[%s5 + $0x4a0] sm:$0xff]
    %v589 = vld [vmem:[%s5 + $0x4a8] sm:$0xff]
    %v590 = vld [vmem:[%s5 + $0x4b0] sm:$0xff]
    %v591 = vld [vmem:[%s5 + $0x4b8] sm:$0xff]
    %v592 = vld [vmem:[%s5 + $0x4c0] sm:$0xff]
    %v593 = vld [vmem:[%s5 + $0x4c8] sm:$0xff]
    %v594 = vld [vmem:[%s5 + $0x4d0] sm:$0xff]
    %v595 = vld [vmem:[%s5 + $0x4d8] sm:$0xff]
    %v596 = vld [vmem:[%s5 + $0x4e0] sm:$0xff]
    %v597 = vld [vmem:[%s5 + $0x4e8] sm:$0xff]
    %v598 = vld [vmem:[%s5 + $0x4f0] sm:$0xff]
    %v599 = vld [vmem:[%s5 + $0x4f8] sm:$0xff]
    %v600 = vld [vmem:[%s5 + $0x500] sm:$0xff]
    %v601 = vld [vmem:[%s5 + $0x508] sm:$0xff]
    %v602 = vld [vmem:[%s5 + $0x510] sm:$0xff]
    %v603 = vld [vmem:[%s5 + $0x518] sm:$0xff]
    %v604 = vld [vmem:[%s5 + $0x520] sm:$0xff]
    %v605 = vld [vmem:[%s5 + $0x528] sm:$0xff]
    %v606 = vld [vmem:[%s5 + $0x530] sm:$0xff]
    %v607 = vld [vmem:[%s5 + $0x538] sm:$0xff]
    %v608 = vld [vmem:[%s5 + $0x540] sm:$0xff]
    %v609 = vld [vmem:[%s5 + $0x548] sm:$0xff]
    %v610 = vld [vmem:[%s5 + $0x550] sm:$0xff]
    %v611 = vld [vmem:[%s5 + $0x558] sm:$0xff]
    %v612 = vld [vmem:[%s5 + $0x560] sm:$0xff]
    %v613 = vld [vmem:[%s5 + $0x568] sm:$0xff]
    %v614 = vld [vmem:[%s5 + $0x570] sm:$0xff]
    %v615 = vld [vmem:[%s5 + $0x578] sm:$0xff]
    %v616 = vld [vmem:[%s5 + $0x580] sm:$0xff]
    %v617 = vld [vmem:[%s5 + $0x588] sm:$0xff]
    %v618 = vld [vmem:[%s5 + $0x590] sm:$0xff]
    %v619 = vld [vmem:[%s5 + $0x598] sm:$0xff]
    %v620 = vld [vmem:[%s5 + $0x5a0] sm:$0xff]
    %v621 = vld [vmem:[%s5 + $0x5a8] sm:$0xff]
    %v622 = vld [vmem:[%s5 + $0x5b0] sm:$0xff]
    %v623 = vld [vmem:[%s5 + $0x5b8] sm:$0xff]
    %v624 = vld [vmem:[%s5 + $0x5c0] sm:$0xff]
    %v625 = vld [vmem:[%s5 + $0x5c8] sm:$0xff]
    %v626 = vld [vmem:[%s5 + $0x5d0] sm:$0xff]
    %v627 = vld [vmem:[%s5 + $0x5d8] sm:$0xff]
    %v628 = vld [vmem:[%s5 + $0x5e0] sm:$0xff]
    %v629 = vld [vmem:[%s5 + $0x5e8] sm:$0xff]
    %v630 = vld [vmem:[%s5 + $0x5f0] sm:$0xff]
    %v631 = vld [vmem:[%s5 + $0x5f8] sm:$0xff]
    %v632 = vld [vmem:[%s5 + $0x600] sm:$0xff]
    %v633 = vld [vmem:[%s5 + $0x608] sm:$0xff]
    %v634 = vld [vmem:[%s5 + $0x610] sm:$0xff]
    %v635 = vld [vmem:[%s5 + $0x618] sm:$0xff]
    %v636 = vld [vmem:[%s5 + $0x620] sm:$0xff]
    %v637 = vld [vmem:[%s5 + $0x628] sm:$0xff]
    %v638 = vld [vmem:[%s5 + $0x630] sm:$0xff]
    %v639 = vld [vmem:[%s5 + $0x638] sm:$0xff]
    %v640 = vld [vmem:[%s5 + $0x640] sm:$0xff]
    %v641 = vld [vmem:[%s5 + $0x648] sm:$0xff]
    %v642 = vld [vmem:[%s5 + $0x650] sm:$0xff]
    %v643 = vld [vmem:[%s5 + $0x658] sm:$0xff]
    %v644 = vld [vmem:[%s5 + $0x660] sm:$0xff]
    %v645 = vld [vmem:[%s5 + $0x668] sm:$0xff]
    %v646 = vld [vmem:[%s5 + $0x670] sm:$0xff]
    %v647 = vld [vmem:[%s5 + $0x678] sm:$0xff]
    %v648 = vld [vmem:[%s5 + $0x680] sm:$0xff]
    %v649 = vld [vmem:[%s5 + $0x688] sm:$0xff]
    %v650 = vld [vmem:[%s5 + $0x690] sm:$0xff]
    %v651 = vld [vmem:[%s5 + $0x698] sm:$0xff]
    %v652 = vld [vmem:[%s5 + $0x6a0] sm:$0xff]
    %v653 = vld [vmem:[%s5 + $0x6a8] sm:$0xff]
    %v654 = vld [vmem:[%s5 + $0x6b0] sm:$0xff]
    %v655 = vld [vmem:[%s5 + $0x6b8] sm:$0xff]
    %v656 = vld [vmem:[%s5 + $0x6c0] sm:$0xff]
    %v657 = vld [vmem:[%s5 + $0x6c8] sm:$0xff]
    %v658 = vld [vmem:[%s5 + $0x6d0] sm:$0xff]
    %v659 = vld [vmem:[%s5 + $0x6d8] sm:$0xff]
    %v660 = vld [vmem:[%s5 + $0x6e0] sm:$0xff]
    %v661 = vld [vmem:[%s5 + $0x6e8] sm:$0xff]
    %v662 = vld [vmem:[%s5 + $0x6f0] sm:$0xff]
    %v663 = vld [vmem:[%s5 + $0x6f8] sm:$0xff]
    %v664 = vld [vmem:[%s5 + $0x700] sm:$0xff]
    %v665 = vld [vmem:[%s5 + $0x708] sm:$0xff]
    %v666 = vld [vmem:[%s5 + $0x710] sm:$0xff]
    %v667 = vld [vmem:[%s5 + $0x718] sm:$0xff]
    %v668 = vld [vmem:[%s5 + $0x720] sm:$0xff]
    %v669 = vld [vmem:[%s5 + $0x728] sm:$0xff]
    %v670 = vld [vmem:[%s5 + $0x730] sm:$0xff]
    %v671 = vld [vmem:[%s5 + $0x738] sm:$0xff]
    %v672 = vld [vmem:[%s5 + $0x740] sm:$0xff]
    %v673 = vld [vmem:[%s5 + $0x748] sm:$0xff]
    %v674 = vld [vmem:[%s5 + $0x750] sm:$0xff]
    %v675 = vld [vmem:[%s5 + $0x758] sm:$0xff]
    %v676 = vld [vmem:[%s5 + $0x760] sm:$0xff]
    %v677 = vld [vmem:[%s5 + $0x768] sm:$0xff]
    %v678 = vld [vmem:[%s5 + $0x770] sm:$0xff]
    %v679 = vld [vmem:[%s5 + $0x778] sm:$0xff]
    %v680 = vld [vmem:[%s5 + $0x780] sm:$0xff]
    %v681 = vld [vmem:[%s5 + $0x788] sm:$0xff]
    %v682 = vld [vmem:[%s5 + $0x790] sm:$0xff]
    %v683 = vld [vmem:[%s5 + $0x798] sm:$0xff]
    %v684 = vld [vmem:[%s5 + $0x7a0] sm:$0xff]
    %v685 = vld [vmem:[%s5 + $0x7a8] sm:$0xff]
    %v686 = vld [vmem:[%s5 + $0x7b0] sm:$0xff]
    %v687 = vld [vmem:[%s5 + $0x7b8] sm:$0xff]
    %v688 = vld [vmem:[%s5 + $0x7c0] sm:$0xff]
    %v689 = vld [vmem:[%s5 + $0x7c8] sm:$0xff]
    %v690 = vld [vmem:[%s5 + $0x7d0] sm:$0xff]
    %v691 = vld [vmem:[%s5 + $0x7d8] sm:$0xff]
    %v692 = vld [vmem:[%s5 + $0x7e0] sm:$0xff]
    %v693 = vld [vmem:[%s5 + $0x7e8] sm:$0xff]
    %v694 = vld [vmem:[%s5 + $0x7f0] sm:$0xff]
    %v695 = vld [vmem:[%s5 + $0x7f8] sm:$0xff]
    %v696 = vld [vmem:[%s6] sm:$0xf]
    %v698 = vlaneseq
    %v699 = vshrl.u32 %v698, 7
    %v700 = vsub.s32 0, %v699
    %v701 = vrot.slane %v696, %v700
    %v702 = vlaneseq
    %v703 = vshrl.u32 %v702, 7
    %v704 = vsub.s32 1, %v703
    %v705 = vrot.slane %v696, %v704
    %v706 = vlaneseq
    %v707 = vshrl.u32 %v706, 7
    %v708 = vsub.s32 2, %v707
    %v709 = vrot.slane %v696, %v708
    %v710 = vlaneseq
    %v711 = vshrl.u32 %v710, 7
    %v712 = vsub.s32 3, %v711
    %v713 = vrot.slane %v696, %v712
    %718 = vmatprep.subr.mxu0 %v441
    %719 = vmatpush1.msra.mxu0 %v440
    %720 = vmatprep.subr.mxu0 %v445
    %721 = vmatpush1.msra.mxu0 %v444
    %722 = vmatprep.subr.mxu0 %v449
    %723 = vmatpush1.msra.mxu0 %v448
    %724 = vmatprep.subr.mxu0 %v453
    %725 = vmatpush1.msra.mxu0 %v452
    %726 = vmatprep.subr.mxu0 %v457
    %727 = vmatpush1.msra.mxu0 %v456
    %728 = vmatprep.subr.mxu0 %v461
    %729 = vmatpush1.msra.mxu0 %v460
    %730 = vmatprep.subr.mxu0 %v465
    %731 = vmatpush1.msra.mxu0 %v464
    %732 = vmatprep.subr.mxu0 %v469
    %733 = vmatpush1.msra.mxu0 %v468
    %734 = vmatprep.subr.mxu0 %v473
    %735 = vmatpush1.msra.mxu0 %v472
    %736 = vmatprep.subr.mxu0 %v477
    %737 = vmatpush1.msra.mxu0 %v476
    %738 = vmatprep.subr.mxu0 %v481
    %739 = vmatpush1.msra.mxu0 %v480
    %740 = vmatprep.subr.mxu0 %v485
    %741 = vmatpush1.msra.mxu0 %v484
    %742 = vmatprep.subr.mxu0 %v489
    %743 = vmatpush1.msra.mxu0 %v488
    %744 = vmatprep.subr.mxu0 %v493
    %745 = vmatpush1.msra.mxu0 %v492
    %746 = vmatprep.subr.mxu0 %v497
    %747 = vmatpush1.msra.mxu0 %v496
    %748 = vmatprep.subr.mxu0 %v501
    %749 = vmatpush1.msra.mxu0 %v500
    %750 = vmatprep.subr.mxu0 %v505
    %751 = vmatpush1.msra.mxu0 %v504
    %752 = vmatprep.subr.mxu0 %v509
    %753 = vmatpush1.msra.mxu0 %v508
    %754 = vmatprep.subr.mxu0 %v513
    %755 = vmatpush1.msra.mxu0 %v512
    %756 = vmatprep.subr.mxu0 %v517
    %757 = vmatpush1.msra.mxu0 %v516
    %758 = vmatprep.subr.mxu0 %v521
    %759 = vmatpush1.msra.mxu0 %v520
    %760 = vmatprep.subr.mxu0 %v525
    %761 = vmatpush1.msra.mxu0 %v524
    %762 = vmatprep.subr.mxu0 %v529
    %763 = vmatpush1.msra.mxu0 %v528
    %764 = vmatprep.subr.mxu0 %v533
    %765 = vmatpush1.msra.mxu0 %v532
    %766 = vmatprep.subr.mxu0 %v537
    %767 = vmatpush1.msra.mxu0 %v536
    %768 = vmatprep.subr.mxu0 %v541
    %769 = vmatpush1.msra.mxu0 %v540
    %770 = vmatprep.subr.mxu0 %v545
    %771 = vmatpush1.msra.mxu0 %v544
    %772 = vmatprep.subr.mxu0 %v549
    %773 = vmatpush1.msra.mxu0 %v548
    %774 = vmatprep.subr.mxu0 %v553
    %775 = vmatpush1.msra.mxu0 %v552
    %776 = vmatprep.subr.mxu0 %v557
    %777 = vmatpush1.msra.mxu0 %v556
    %778 = vmatprep.subr.mxu0 %v561
    %779 = vmatpush1.msra.mxu0 %v560
    %780 = vmatprep.subr.mxu0 %v565
    %781 = vmatpush1.msra.mxu0 %v564
    %782 = vmatprep.mubr.f32.mxu0 %v437
    %783 = vmatmul.mubr.f32.gmra.mrb[0].mxu0 %v436
    %v784 = vpop.f32.mrb[0].mxu0
    %v785 = vadd.f32 %v701, %v784
    %v786 = vpop.f32.mrb[0].mxu0
    %v787 = vadd.f32 %v705, %v786
    %788 = vdwg.mxu0
    %789 = vmatprep.subr.mxu0 %v569
    %790 = vmatpush1.msra.mxu0 %v568
    %791 = vmatprep.subr.mxu0 %v573
    %792 = vmatpush1.msra.mxu0 %v572
    %793 = vmatprep.subr.mxu0 %v577
    %794 = vmatpush1.msra.mxu0 %v576
    %795 = vmatprep.subr.mxu0 %v581
    %796 = vmatpush1.msra.mxu0 %v580
    %797 = vmatprep.subr.mxu0 %v585
    %798 = vmatpush1.msra.mxu0 %v584
    %799 = vmatprep.subr.mxu0 %v589
    %800 = vmatpush1.msra.mxu0 %v588
    %801 = vmatprep.subr.mxu0 %v593
    %802 = vmatpush1.msra.mxu0 %v592
    %803 = vmatprep.subr.mxu0 %v597
    %804 = vmatpush1.msra.mxu0 %v596
    %805 = vmatprep.subr.mxu0 %v601
    %806 = vmatpush1.msra.mxu0 %v600
    %807 = vmatprep.subr.mxu0 %v605
    %808 = vmatpush1.msra.mxu0 %v604
    %809 = vmatprep.subr.mxu0 %v609
    %810 = vmatpush1.msra.mxu0 %v608
    %811 = vmatprep.subr.mxu0 %v613
    %812 = vmatpush1.msra.mxu0 %v612
    %813 = vmatprep.subr.mxu0 %v617
    %814 = vmatpush1.msra.mxu0 %v616
    %815 = vmatprep.subr.mxu0 %v621
    %816 = vmatpush1.msra.mxu0 %v620
    %817 = vmatprep.subr.mxu0 %v625
    %818 = vmatpush1.msra.mxu0 %v624
    %819 = vmatprep.subr.mxu0 %v629
    %820 = vmatpush1.msra.mxu0 %v628
    %821 = vmatprep.subr.mxu0 %v633
    %822 = vmatpush1.msra.mxu0 %v632
    %823 = vmatprep.subr.mxu0 %v637
    %824 = vmatpush1.msra.mxu0 %v636
    %825 = vmatprep.subr.mxu0 %v641
    %826 = vmatpush1.msra.mxu0 %v640
    %827 = vmatprep.subr.mxu0 %v645
    %828 = vmatpush1.msra.mxu0 %v644
    %829 = vmatprep.subr.mxu0 %v649
    %830 = vmatpush1.msra.mxu0 %v648
    %831 = vmatprep.subr.mxu0 %v653
    %832 = vmatpush1.msra.mxu0 %v652
    %833 = vmatprep.subr.mxu0 %v657
    %834 = vmatpush1.msra.mxu0 %v656
    %835 = vmatprep.subr.mxu0 %v661
    %836 = vmatpush1.msra.mxu0 %v660
    %837 = vmatprep.subr.mxu0 %v665
    %838 = vmatpush1.msra.mxu0 %v664
    %839 = vmatprep.subr.mxu0 %v669
    %840 = vmatpush1.msra.mxu0 %v668
    %841 = vmatprep.subr.mxu0 %v673
    %842 = vmatpush1.msra.mxu0 %v672
    %843 = vmatprep.subr.mxu0 %v677
    %844 = vmatpush1.msra.mxu0 %v676
    %845 = vmatprep.subr.mxu0 %v681
    %846 = vmatpush1.msra.mxu0 %v680
    %847 = vmatprep.subr.mxu0 %v685
    %848 = vmatpush1.msra.mxu0 %v684
    %849 = vmatprep.subr.mxu0 %v689
    %850 = vmatpush1.msra.mxu0 %v688
    %851 = vmatprep.subr.mxu0 %v693
    %852 = vmatpush1.msra.mxu0 %v692
    %853 = vmatprep.mubr.f32.mxu0 %v439
    %854 = vmatmul.mubr.f32.gmra.mrb[0].mxu0 %v438
    %v855 = vpop.f32.mrb[0].mxu0
    %v856 = vadd.f32 %v785, %v855
    %v857 = vpop.f32.mrb[0].mxu0
    %v858 = vadd.f32 %v787, %v857
    %859 = vdwg.mxu0
    %860 = vmatprep.subr.mxu0 %v443
    %861 = vmatpush1.msra.mxu0 %v442
    %862 = vmatprep.subr.mxu0 %v447
    %863 = vmatpush1.msra.mxu0 %v446
    %864 = vmatprep.subr.mxu0 %v451
    %865 = vmatpush1.msra.mxu0 %v450
    %866 = vmatprep.subr.mxu0 %v455
    %867 = vmatpush1.msra.mxu0 %v454
    %868 = vmatprep.subr.mxu0 %v459
    %869 = vmatpush1.msra.mxu0 %v458
    %870 = vmatprep.subr.mxu0 %v463
    %871 = vmatpush1.msra.mxu0 %v462
    %872 = vmatprep.subr.mxu0 %v467
    %873 = vmatpush1.msra.mxu0 %v466
    %874 = vmatprep.subr.mxu0 %v471
    %875 = vmatpush1.msra.mxu0 %v470
    %876 = vmatprep.subr.mxu0 %v475
    %877 = vmatpush1.msra.mxu0 %v474
    %878 = vmatprep.subr.mxu0 %v479
    %879 = vmatpush1.msra.mxu0 %v478
    %880 = vmatprep.subr.mxu0 %v483
    %881 = vmatpush1.msra.mxu0 %v482
    %882 = vmatprep.subr.mxu0 %v487
    %883 = vmatpush1.msra.mxu0 %v486
    %884 = vmatprep.subr.mxu0 %v491
    %885 = vmatpush1.msra.mxu0 %v490
    %886 = vmatprep.subr.mxu0 %v495
    %887 = vmatpush1.msra.mxu0 %v494
    %888 = vmatprep.subr.mxu0 %v499
    %889 = vmatpush1.msra.mxu0 %v498
    %890 = vmatprep.subr.mxu0 %v503
    %891 = vmatpush1.msra.mxu0 %v502
    %892 = vmatprep.subr.mxu0 %v507
    %893 = vmatpush1.msra.mxu0 %v506
    %894 = vmatprep.subr.mxu0 %v511
    %895 = vmatpush1.msra.mxu0 %v510
    %896 = vmatprep.subr.mxu0 %v515
    %897 = vmatpush1.msra.mxu0 %v514
    %898 = vmatprep.subr.mxu0 %v519
    %899 = vmatpush1.msra.mxu0 %v518
    %900 = vmatprep.subr.mxu0 %v523
    %901 = vmatpush1.msra.mxu0 %v522
    %902 = vmatprep.subr.mxu0 %v527
    %903 = vmatpush1.msra.mxu0 %v526
    %904 = vmatprep.subr.mxu0 %v531
    %905 = vmatpush1.msra.mxu0 %v530
    %906 = vmatprep.subr.mxu0 %v535
    %907 = vmatpush1.msra.mxu0 %v534
    %908 = vmatprep.subr.mxu0 %v539
    %909 = vmatpush1.msra.mxu0 %v538
    %910 = vmatprep.subr.mxu0 %v543
    %911 = vmatpush1.msra.mxu0 %v542
    %912 = vmatprep.subr.mxu0 %v547
    %913 = vmatpush1.msra.mxu0 %v546
    %914 = vmatprep.subr.mxu0 %v551
    %915 = vmatpush1.msra.mxu0 %v550
    %916 = vmatprep.subr.mxu0 %v555
    %917 = vmatpush1.msra.mxu0 %v554
    %918 = vmatprep.subr.mxu0 %v559
    %919 = vmatpush1.msra.mxu0 %v558
    %920 = vmatprep.subr.mxu0 %v563
    %921 = vmatpush1.msra.mxu0 %v562
    %922 = vmatprep.subr.mxu0 %v567
    %923 = vmatpush1.msra.mxu0 %v566
    %924 = vmatprep.mubr.f32.mxu0 %v437
    %925 = vmatmul.mubr.f32.gmra.mrb[0].mxu0 %v436
    %v926 = vpop.f32.mrb[0].mxu0
    %v927 = vadd.f32 %v709, %v926
    %v928 = vpop.f32.mrb[0].mxu0
    %v929 = vadd.f32 %v713, %v928
    %930 = vdwg.mxu0
    %931 = vmatprep.subr.mxu0 %v571
    %932 = vmatpush1.msra.mxu0 %v570
    %933 = vmatprep.subr.mxu0 %v575
    %934 = vmatpush1.msra.mxu0 %v574
    %935 = vmatprep.subr.mxu0 %v579
    %936 = vmatpush1.msra.mxu0 %v578
    %937 = vmatprep.subr.mxu0 %v583
    %938 = vmatpush1.msra.mxu0 %v582
    %939 = vmatprep.subr.mxu0 %v587
    %940 = vmatpush1.msra.mxu0 %v586
    %941 = vmatprep.subr.mxu0 %v591
    %942 = vmatpush1.msra.mxu0 %v590
    %943 = vmatprep.subr.mxu0 %v595
    %944 = vmatpush1.msra.mxu0 %v594
    %945 = vmatprep.subr.mxu0 %v599
    %946 = vmatpush1.msra.mxu0 %v598
    %947 = vmatprep.subr.mxu0 %v603
    %948 = vmatpush1.msra.mxu0 %v602
    %949 = vmatprep.subr.mxu0 %v607
    %950 = vmatpush1.msra.mxu0 %v606
    %951 = vmatprep.subr.mxu0 %v611
    %952 = vmatpush1.msra.mxu0 %v610
    %953 = vmatprep.subr.mxu0 %v615
    %954 = vmatpush1.msra.mxu0 %v614
    %955 = vmatprep.subr.mxu0 %v619
    %956 = vmatpush1.msra.mxu0 %v618
    %957 = vmatprep.subr.mxu0 %v623
    %958 = vmatpush1.msra.mxu0 %v622
    %959 = vmatprep.subr.mxu0 %v627
    %960 = vmatpush1.msra.mxu0 %v626
    %961 = vmatprep.subr.mxu0 %v631
    %962 = vmatpush1.msra.mxu0 %v630
    %963 = vmatprep.subr.mxu0 %v635
    %964 = vmatpush1.msra.mxu0 %v634
    %965 = vmatprep.subr.mxu0 %v639
    %966 = vmatpush1.msra.mxu0 %v638
    %967 = vmatprep.subr.mxu0 %v643
    %968 = vmatpush1.msra.mxu0 %v642
    %969 = vmatprep.subr.mxu0 %v647
    %970 = vmatpush1.msra.mxu0 %v646
    %971 = vmatprep.subr.mxu0 %v651
    %972 = vmatpush1.msra.mxu0 %v650
    %973 = vmatprep.subr.mxu0 %v655
    %974 = vmatpush1.msra.mxu0 %v654
    %975 = vmatprep.subr.mxu0 %v659
    %976 = vmatpush1.msra.mxu0 %v658
    %977 = vmatprep.subr.mxu0 %v663
    %978 = vmatpush1.msra.mxu0 %v662
    %979 = vmatprep.subr.mxu0 %v667
    %980 = vmatpush1.msra.mxu0 %v666
    %981 = vmatprep.subr.mxu0 %v671
    %982 = vmatpush1.msra.mxu0 %v670
    %983 = vmatprep.subr.mxu0 %v675
    %984 = vmatpush1.msra.mxu0 %v674
    %985 = vmatprep.subr.mxu0 %v679
    %986 = vmatpush1.msra.mxu0 %v678
    %987 = vmatprep.subr.mxu0 %v683
    %988 = vmatpush1.msra.mxu0 %v682
    %989 = vmatprep.subr.mxu0 %v687
    %990 = vmatpush1.msra.mxu0 %v686
    %991 = vmatprep.subr.mxu0 %v691
    %992 = vmatpush1.msra.mxu0 %v690
    %993 = vmatprep.subr.mxu0 %v695
    %994 = vmatpush1.msra.mxu0 %v694
    %995 = vmatprep.mubr.f32.mxu0 %v439
    %996 = vmatmul.mubr.f32.gmra.mrb[0].mxu0 %v438
    %v997 = vpop.f32.mrb[0].mxu0
    %v998 = vadd.f32 %v927, %v997
    %v999 = vpop.f32.mrb[0].mxu0
    %v1000 = vadd.f32 %v929, %v999
    %1001 = vdwg.mxu0
    %v1006 = vcombine.low %v856, %v858
    %v1007 = vcombine.high %v856, %v858
    %v1008 = vcombine.low %v998, %v1000
    %v1009 = vcombine.high %v998, %v1000
    %v1011 = vunpack.c.l.s4 1966171168
    %v1012 = vunpack.c.0.s8 %v1011
    %v1013 = vlaneseq
    %v1014 = vshrl.u32 %v1013, 7
    %v1015 = vsub.s32 %v1012, %v1014
    %v1016 = vrot.slane %v1006, %v1015
    %v1018 = vunpack.c.l.s4 1966171168
    %v1019 = vunpack.c.0.s8 %v1018
    %v1020 = vlaneseq
    %v1021 = vshrl.u32 %v1020, 7
    %v1022 = vsub.s32 %v1019, %v1021
    %v1023 = vrot.slane %v1007, %v1022
    %v1025 = vunpack.c.l.s4 1966171168
    %v1026 = vunpack.c.0.s8 %v1025
    %v1027 = vlaneseq
    %v1028 = vshrl.u32 %v1027, 7
    %v1029 = vsub.s32 %v1026, %v1028
    %v1030 = vrot.slane %v1008, %v1029
    %v1032 = vunpack.c.l.s4 1966171168
    %v1033 = vunpack.c.0.s8 %v1032
    %v1034 = vlaneseq
    %v1035 = vshrl.u32 %v1034, 7
    %v1036 = vsub.s32 %v1033, %v1035
    %v1037 = vrot.slane %v1009, %v1036
    %v1038 = vcombine.low %v1016, %v1030
    %v1039 = vcombine.high %v1016, %v1030
    %v1040 = vcombine.low %v1023, %v1037
    %v1041 = vcombine.high %v1023, %v1037
    %v1043 = vunpack.c.l.s4 1966171168
    %v1044 = vunpack.c.0.s8 %v1043
    %v1045 = vlaneseq
    %v1046 = vshrl.u32 %v1045, 7
    %v1047 = vsub.s32 %v1044, %v1046
    %v1048 = vrot.slane %v1038, %v1047
    %v1050 = vunpack.c.l.s4 1966171168
    %v1051 = vunpack.c.0.s8 %v1050
    %v1052 = vlaneseq
    %v1053 = vshrl.u32 %v1052, 7
    %v1054 = vsub.s32 %v1051, %v1053
    %v1055 = vrot.slane %v1040, %v1054
    %v1057 = vunpack.c.l.s4 1966171168
    %v1058 = vunpack.c.0.s8 %v1057
    %v1059 = vlaneseq
    %v1060 = vshrl.u32 %v1059, 7
    %v1061 = vsub.s32 %v1058, %v1060
    %v1062 = vrot.slane %v1039, %v1061
    %v1064 = vunpack.c.l.s4 1966171168
    %v1065 = vunpack.c.0.s8 %v1064
    %v1066 = vlaneseq
    %v1067 = vshrl.u32 %v1066, 7
    %v1068 = vsub.s32 %v1065, %v1067
    %v1069 = vrot.slane %v1041, %v1068
    %v1070 = vcombine.high %v1048, %v1048
    %v1071 = vcombine.high %v1055, %v1055
    %v1072 = vcombine.high %v1062, %v1062
    %v1073 = vcombine.high %v1069, %v1069
    %v1082 = vlaneseq
    %vm1083 = vcmp.ge.s32.totalorder %v1082, 0
    %vm1084 = vcmp.lt.s32.totalorder %v1082, 480
    %vm1085 = vmand %vm1083, %vm1084
    %1086 = vst.msk [vmem:[#allocation2] sm:$0xf] %vm1085, %v1048
    %1087 = vst.msk [vmem:[#allocation2 + $0x4] sm:$0xf] %vm1085, %v1062
    %1088 = vst.msk [vmem:[#allocation2 + $0x8] sm:$0xf] %vm1085, %v1070
    %1089 = vst.msk [vmem:[#allocation2 + $0xc] sm:$0xf] %vm1085, %v1072
    %1090 = vst.msk [vmem:[#allocation2 + $0x10] sm:$0xf] %vm1085, %v1055
    %1091 = vst.msk [vmem:[#allocation2 + $0x14] sm:$0xf] %vm1085, %v1069
    %1092 = vst.msk [vmem:[#allocation2 + $0x18] sm:$0xf] %vm1085, %v1071
    %1093 = vst.msk [vmem:[#allocation2 + $0x1c] sm:$0xf] %vm1085, %v1073
    // Predicated region
    $region30: #{abalone_forward.1} parent=1 // pred_check
      _
    $region31: #{abalone_forward.1} parent=1 // pred_check_branch
      %1095 = sbr.rel (0) target = $region33
    $region32: #{abalone_forward.1} parent=1 // pred_region
      // Predicated region
      $region34: #{abalone_forward.1} parent=32 // pred_check
        _
      $region35: #{abalone_forward.1} parent=32 // pred_check_branch
        %1097 = sbr.rel (0) target = $region37
      $region36: #{abalone_forward.1} parent=32 // pred_region
        // Predicated region
        $region38: #{abalone_forward.1} parent=36 // pred_check
          _
        $region39: #{abalone_forward.1} parent=36 // pred_check_branch
          %1099 = sbr.rel target = $region41
        $region40: #{abalone_forward.1} parent=36 // pred_region
          // Predicated region
          $region53: #{abalone_forward.1} parent=40 // pred_check
            _
          $region54: #{abalone_forward.1} parent=40 // pred_check_branch
            %1114 = sbr.rel (0) target = $region56
          $region55: #{abalone_forward.1} parent=40 // pred_region
            loop: start=0, step=1, limit=1
            $region57: #{abalone_forward.1} parent=55 // loop_pre_header
              _
            $region58: #{abalone_forward.1} parent=55 // loop_header
              %s1117 = sphi 0, %s1121
              %p1118 = scmp.ge.s32.totalorder %s1117, 1
              %s1122 = sphi [#allocation2], [#allocation2]
              %s1123 = sphi %s7, %s7
            $region59: #{abalone_forward.1} parent=55 // loop_header_branch
              %1120 = sbr.rel (%p1118) target = $region63
            $region60: #{abalone_forward.1} parent=55 // loop_body
              %v1124 = vld [vmem:[%s1122] sm:$0xf]
              %1125 = vst [vmem:[%s1123] sm:$0xf] %v1124
            $region61: #{abalone_forward.1} parent=55 // loop_footer
              %s1121 = sadd.s32 1, %s1117
            $region62: #{abalone_forward.1} parent=55 // loop_footer_branch
              %1116 = sbr.rel target = $region58
            $region63: #{abalone_forward.1} parent=55 // loop_exit
              _
          $region56: #{abalone_forward.1} parent=40 // pred_fallthru
            _
        $region41: #{abalone_forward.1} parent=36 // pred_fallthru
          _
        // Predicated region
        $region42: #{abalone_forward.1} parent=36 // pred_check
          _
        $region43: #{abalone_forward.1} parent=36 // pred_check_branch
          %1101 = sbr.rel (0) target = $region45
        $region44: #{abalone_forward.1} parent=36 // pred_region
          loop: start=0, step=1, limit=1
          $region46: #{abalone_forward.1} parent=44 // loop_pre_header
            _
          $region47: #{abalone_forward.1} parent=44 // loop_header
            %s1104 = sphi 0, %s1108
            %p1105 = scmp.ge.s32.totalorder %s1104, 1
            %s1109 = sphi [#allocation2], [#allocation2]
            %s1110 = sphi %s7, %s7
          $region48: #{abalone_forward.1} parent=44 // loop_header_branch
            %1107 = sbr.rel (%p1105) target = $region52
          $region49: #{abalone_forward.1} parent=44 // loop_body
            %v1111 = vld [vmem:[%s1109] sm:$0xf]
            %1112 = vst [vmem:[%s1110] sm:$0xf] %v1111
          $region50: #{abalone_forward.1} parent=44 // loop_footer
            %s1108 = sadd.s32 1, %s1104
          $region51: #{abalone_forward.1} parent=44 // loop_footer_branch
            %1103 = sbr.rel target = $region47
          $region52: #{abalone_forward.1} parent=44 // loop_exit
            _
        $region45: #{abalone_forward.1} parent=36 // pred_fallthru
          _
      $region37: #{abalone_forward.1} parent=32 // pred_fallthru
        _
      %1126 = vnop
    $region33: #{abalone_forward.1} parent=1 // pred_fallthru
      _
    // Predicated region
    $region64: #{abalone_forward.1} parent=1 // pred_check
      _
    $region65: #{abalone_forward.1} parent=1 // pred_check_branch
      %1128 = sbr.rel (0) target = $region67
    $region66: #{abalone_forward.1} parent=1 // pred_region
      _
    $region67: #{abalone_forward.1} parent=1 // pred_fallthru
      _

</llo_original>
